<compile_context>
chip_gen: v6e
topology: v6e:2x2x1
jax: 0.10.0
libtpu: 0.0.40
codegen_flags: <defaults>
</compile_context>

<pallas_src>
import jax
import jax.numpy as jnp
from jax.experimental import pallas as pl
from jax.experimental.pallas import tpu as pltpu


# ----------------------------- Pallas kernel --------------------------------
def _cfg_denoise_kernel(scales_ref, sigma_col_ref, z_ref, cc_c_ref, cc_u_ref,
                        cp_c_ref, cp_u_ref, wz_blk_ref, wcc_blk_ref, o_ref):
    """Single gridless invocation; all refs hold the full (tiny) arrays.

    scales_ref    (SMEM): (2,)       [text_cfg_scale, image_cfg_scale]
    sigma_col_ref (VMEM): (BC, 1)    sigma repeated per output row (b-major)
    z_ref         (VMEM): (BC, HW)   latent, rows = b*C+c, HW on lanes
    cc_c_ref      (VMEM): (BC, HW)   cond   c_concat
    cc_u_ref      (VMEM): (BC, HW)   uncond c_concat
    cp_c_ref      (VMEM): (BC, 1)    mean(cond_ca)@w_ctx + bias   (hoisted)
    cp_u_ref      (VMEM): (BC, 1)    mean(uncond_ca)@w_ctx + bias (hoisted)
    wz_blk_ref    (VMEM): (BC, BC)   kron(I_B, w_in[:C].T)  — batch block-diag
    wcc_blk_ref   (VMEM): (BC, BC)   kron(I_B, w_in[C:].T)
    o_ref         (VMEM): (BC, HW)   CFG-combined output
    """
    text_cfg = scales_ref[0]
    image_cfg = scales_ref[1]
    # Collapsed CFG coefficients (drops 2 vector subs + 1 add per tensor).
    k_cond = text_cfg + image_cfg
    k_img = 0.5 - text_cfg
    k_txt = 0.5 - image_cfg

    # Karras preconditioning applied to the *network input*:
    # c_in = rsqrt(sigma^2 + 1), one EUP rsqrt, broadcast along lanes.
    sig = sigma_col_ref[...]                         # (BC, 1)
    c_in = jax.lax.rsqrt(sig * sig + 1.0)            # (BC, 1)

    z = z_ref[...] * c_in                            # (BC, HW) full tiles
    cc_c = cc_c_ref[...] * c_in
    cc_u = cc_u_ref[...] * c_in

    # One dense (BC,BC)@(BC,HW) dot per term: full 8-sublane contraction and
    # full 8-row output.  hz is shared by both distinct c_concat chunks
    # (CFG chunks 0 & 1 additionally share h_a entirely).
    wz_blk = wz_blk_ref[...]
    wcc_blk = wcc_blk_ref[...]
    hz = jnp.dot(wz_blk, z, preferred_element_type=jnp.float32)
    h_a = hz + jnp.dot(wcc_blk, cc_c, preferred_element_type=jnp.float32)
    h_b = hz + jnp.dot(wcc_blk, cc_u, preferred_element_type=jnp.float32)

    cp_c = cp_c_ref[...]                             # (BC, 1), bias folded in
    cp_u = cp_u_ref[...]

    out_cond = jnp.tanh(h_a + cp_c)   # crossattn=cond,   concat=cond
    out_img = jnp.tanh(h_a + cp_u)    # crossattn=uncond, concat=cond
    out_txt = jnp.tanh(h_b + cp_c)    # crossattn=cond,   concat=uncond

    res = k_cond * out_cond + k_img * out_img + k_txt * out_txt
    o_ref[...] = res.astype(o_ref.dtype)             # dense (8,128)x2 store


# ------------------------------- wrapper -------------------------------------
@jax.jit
def _cfg_denoiser_jit(z, sigma, cond_ca, uncond_ca, cond_cc, uncond_cc,
                      scales, w_in, w_ctx, bias):
    B, C, H, W = z.shape
    HW = H * W
    BC = B * C
    f32 = jnp.float32

    # NCHW -> (B*C, HW): pure contiguous reshape, no transposes.
    # Rows are b-major (b*C + c); HW on lanes -> lane-dense, full f32 sublanes.
    z2 = z.reshape(BC, HW).astype(f32)
    cc_c2 = cond_cc.reshape(BC, HW).astype(f32)
    cc_u2 = uncond_cc.reshape(BC, HW).astype(f32)

    # sigma per output row (b-major), as a (BC,1) column.
    sigma_col = jnp.repeat(sigma.astype(f32), C)[:, None]

    # Hoisted tiny crossattn projection with bias folded in, as (BC,1) columns.
    # (Whole wrapper is jitted -> no extra dispatch; ~1K MACs total.)
    cp_c = (jnp.mean(cond_ca, axis=1) @ w_ctx + bias).reshape(BC, 1).astype(f32)
    cp_u = (jnp.mean(uncond_ca, axis=1) @ w_ctx + bias).reshape(BC, 1).astype(f32)

    # Batch-block-diagonal weights: each in-kernel contraction becomes one
    # full-depth (BC,BC)@(BC,HW) dot instead of per-b K=4 slivers.
    eye_b = jnp.eye(B, dtype=f32)
    wz_blk = jnp.kron(eye_b, w_in[:C].T.astype(f32))     # (BC, BC)
    wcc_blk = jnp.kron(eye_b, w_in[C:].T.astype(f32))    # (BC, BC)

    vmem = pl.BlockSpec(memory_space=pltpu.MemorySpace.VMEM)
    smem = pl.BlockSpec(memory_space=pltpu.MemorySpace.SMEM)

    out = pl.pallas_call(
        _cfg_denoise_kernel,
        out_shape=jax.ShapeDtypeStruct((BC, HW), f32),
        in_specs=[smem, vmem, vmem, vmem, vmem, vmem, vmem, vmem, vmem],
        out_specs=vmem,
    )(scales.astype(f32), sigma_col, z2, cc_c2, cc_u2, cp_c, cp_u,
      wz_blk, wcc_blk)

    # Already channel-major: plain reshape back to NCHW, no transpose.
    return out.reshape(B, C, H, W)


def cfg_denoiser_forward(z, sigma, cond, uncond,
                         text_cfg_scale, image_cfg_scale, params):
    w_in, w_ctx, bias = params
    scales = jnp.array([text_cfg_scale, image_cfg_scale], jnp.float32)
    return _cfg_denoiser_jit(z, sigma,
                             cond['c_crossattn'][0], uncond['c_crossattn'][0],
                             cond['c_concat'][0], uncond['c_concat'][0],
                             scales, w_in, w_ctx, bias)


# --------------------------- pure-JAX reference -------------------------------
def _inner_model_ref(x_rows, ctx, sigma, w_in, w_ctx, bias):
    c_in = 1.0 / jnp.sqrt(sigma * sigma + 1.0)                # (3B,)
    h = jnp.einsum('bnc,cd->bnd', x_rows, w_in)               # (3B, HW, C)
    cp = jnp.mean(ctx, axis=1) @ w_ctx                        # (3B, C)
    return jnp.tanh(h * c_in[:, None, None] + cp[:, None, :] + bias)


def cfg_denoiser_reference(z, sigma, cond, uncond, t_cfg, i_cfg, params):
    w_in, w_ctx, bias = params
    B, C, H, W = z.shape
    HW = H * W
    to_rows = lambda x: jnp.transpose(x, (0, 2, 3, 1)).reshape(x.shape[0], HW, x.shape[1])

    cfg_z = jnp.tile(to_rows(z), (3, 1, 1))                                   # repeat b->3b
    cfg_sigma = jnp.tile(sigma.astype(jnp.float32), 3)
    cfg_ca = jnp.concatenate([cond['c_crossattn'][0], uncond['c_crossattn'][0],
                              cond['c_crossattn'][0]], axis=0)
    cfg_cc = jnp.concatenate([to_rows(cond['c_concat'][0]),
                              to_rows(cond['c_concat'][0]),
                              to_rows(uncond['c_concat'][0])], axis=0)
    x = jnp.concatenate([cfg_z, cfg_cc], axis=-1)

    out = _inner_model_ref(x, cfg_ca, cfg_sigma, w_in, w_ctx, bias)           # (3B, HW, C)
    out_cond, out_img, out_txt = out[:B], out[B:2 * B], out[2 * B:]
    res = (0.5 * (out_img + out_txt)
           + t_cfg * (out_cond - out_img)
           + i_cfg * (out_cond - out_txt))
    return res.reshape(B, H, W, C).transpose(0, 3, 1, 2)


# ---------------------------------- main --------------------------------------
if __name__ == "__main__":
    key = jax.random.PRNGKey(0)
    kz, ks, kcc, kuc, kca, kua, kw1, kw2, kb = jax.random.split(key, 9)

    B, C, H, W = 2, 4, 16, 16   # latent-like NCHW
    T, D = 8, 32                # crossattn tokens / hidden

    z = jax.random.normal(kz, (B, C, H, W), jnp.float32)
    sigma = jax.random.uniform(ks, (B,), jnp.float32, minval=0.1, maxval=2.0)
    cond = {
        'c_crossattn': [jax.random.normal(kca, (B, T, D), jnp.float32)],
        'c_concat': [jax.random.normal(kcc, (B, C, H, W), jnp.float32)],
    }
    uncond = {
        'c_crossattn': [jax.random.normal(kua, (B, T, D), jnp.float32)],
        'c_concat': [jax.random.normal(kuc, (B, C, H, W), jnp.float32)],
    }

    # deterministic synthetic inner-model parameters
    w_in = jax.random.normal(kw1, (2 * C, C), jnp.float32) * 0.1
    w_ctx = jax.random.normal(kw2, (D, C), jnp.float32) * 0.1
    bias = jax.random.normal(kb, (1, C), jnp.float32) * 0.1
    params = (w_in, w_ctx, bias)

    text_cfg_scale = 7.5
    image_cfg_scale = 1.5

    out = cfg_denoiser_forward(z, sigma, cond, uncond,
                               text_cfg_scale, image_cfg_scale, params)
    out = jax.block_until_ready(out)

    ref = cfg_denoiser_reference(z, sigma, cond, uncond,
                                 text_cfg_scale, image_cfg_scale, params)
    assert out.shape == z.shape, (out.shape, z.shape)
    assert jnp.allclose(out, ref, atol=1e-4, rtol=1e-4), "mismatch vs reference"
    print("KERNEL_OK")
</pallas_src>

<mosaic_0001>
module attributes {stable_mosaic.version = 11 : i64} {
  func.func @_cfg_denoise_kernel(%arg0: memref<2xf32, #tpu.memory_space<smem>>, %arg1: memref<8x1xf32, #tpu.memory_space<vmem>>, %arg2: memref<8x256xf32, #tpu.memory_space<vmem>>, %arg3: memref<8x256xf32, #tpu.memory_space<vmem>>, %arg4: memref<8x256xf32, #tpu.memory_space<vmem>>, %arg5: memref<8x1xf32, #tpu.memory_space<vmem>>, %arg6: memref<8x1xf32, #tpu.memory_space<vmem>>, %arg7: memref<8x8xf32, #tpu.memory_space<vmem>>, %arg8: memref<8x8xf32, #tpu.memory_space<vmem>>, %arg9: memref<8x256xf32, #tpu.memory_space<vmem>>) attributes {dimension_semantics = [], scalar_prefetch = 0 : i64, scratch_operands = 0 : i64, tpu.core_type = #tpu.core_type<tc>} {
    %c0 = arith.constant 0 : index
    %0 = memref.load %arg0[%c0] : memref<2xf32, #tpu.memory_space<smem>>
    %c1 = arith.constant 1 : index
    %1 = memref.load %arg0[%c1] : memref<2xf32, #tpu.memory_space<smem>>
    %2 = arith.addf %0, %1 : f32
    %cst = arith.constant 5.000000e-01 : f32
    %3 = arith.subf %cst, %0 : f32
    %cst_0 = arith.constant 5.000000e-01 : f32
    %4 = arith.subf %cst_0, %1 : f32
    %c0_1 = arith.constant 0 : index
    %c0_2 = arith.constant 0 : index
    %5 = vector.load %arg1[%c0_1, %c0_2] : memref<8x1xf32, #tpu.memory_space<vmem>>, vector<8x1xf32>
    %6 = arith.mulf %5, %5 : vector<8x1xf32>
    %cst_3 = arith.constant 1.000000e+00 : f32
    %7 = vector.broadcast %cst_3 : f32 to vector<8x1xf32>
    %8 = arith.addf %6, %7 : vector<8x1xf32>
    %9 = math.rsqrt %8 : vector<8x1xf32>
    %c0_4 = arith.constant 0 : index
    %c0_5 = arith.constant 0 : index
    %10 = vector.load %arg2[%c0_4, %c0_5] : memref<8x256xf32, #tpu.memory_space<vmem>>, vector<8x256xf32>
    %11 = vector.broadcast %9 : vector<8x1xf32> to vector<8x256xf32>
    %12 = arith.mulf %10, %11 : vector<8x256xf32>
    %c0_6 = arith.constant 0 : index
    %c0_7 = arith.constant 0 : index
    %13 = vector.load %arg3[%c0_6, %c0_7] : memref<8x256xf32, #tpu.memory_space<vmem>>, vector<8x256xf32>
    %14 = vector.broadcast %9 : vector<8x1xf32> to vector<8x256xf32>
    %15 = arith.mulf %13, %14 : vector<8x256xf32>
    %c0_8 = arith.constant 0 : index
    %c0_9 = arith.constant 0 : index
    %16 = vector.load %arg4[%c0_8, %c0_9] : memref<8x256xf32, #tpu.memory_space<vmem>>, vector<8x256xf32>
    %17 = vector.broadcast %9 : vector<8x1xf32> to vector<8x256xf32>
    %18 = arith.mulf %16, %17 : vector<8x256xf32>
    %c0_10 = arith.constant 0 : index
    %c0_11 = arith.constant 0 : index
    %19 = vector.load %arg7[%c0_10, %c0_11] : memref<8x8xf32, #tpu.memory_space<vmem>>, vector<8x8xf32>
    %c0_12 = arith.constant 0 : index
    %c0_13 = arith.constant 0 : index
    %20 = vector.load %arg8[%c0_12, %c0_13] : memref<8x8xf32, #tpu.memory_space<vmem>>, vector<8x8xf32>
    %cst_14 = arith.constant dense<0.000000e+00> : vector<8x256xf32>
    %21 = tpu.matmul %19, %12, %cst_14 {dimension_numbers = #tpu.dot_dimension_numbers<[1], [0], [0], [1], [0, 0, 1, 1], [], []>} : vector<8x8xf32>, vector<8x256xf32>, vector<8x256xf32> -> vector<8x256xf32>
    %cst_15 = arith.constant dense<0.000000e+00> : vector<8x256xf32>
    %22 = tpu.matmul %20, %15, %cst_15 {dimension_numbers = #tpu.dot_dimension_numbers<[1], [0], [0], [1], [0, 0, 1, 1], [], []>} : vector<8x8xf32>, vector<8x256xf32>, vector<8x256xf32> -> vector<8x256xf32>
    %23 = arith.addf %21, %22 : vector<8x256xf32>
    %cst_16 = arith.constant dense<0.000000e+00> : vector<8x256xf32>
    %24 = tpu.matmul %20, %18, %cst_16 {dimension_numbers = #tpu.dot_dimension_numbers<[1], [0], [0], [1], [0, 0, 1, 1], [], []>} : vector<8x8xf32>, vector<8x256xf32>, vector<8x256xf32> -> vector<8x256xf32>
    %25 = arith.addf %21, %24 : vector<8x256xf32>
    %c0_17 = arith.constant 0 : index
    %c0_18 = arith.constant 0 : index
    %26 = vector.load %arg5[%c0_17, %c0_18] : memref<8x1xf32, #tpu.memory_space<vmem>>, vector<8x1xf32>
    %c0_19 = arith.constant 0 : index
    %c0_20 = arith.constant 0 : index
    %27 = vector.load %arg6[%c0_19, %c0_20] : memref<8x1xf32, #tpu.memory_space<vmem>>, vector<8x1xf32>
    %28 = vector.broadcast %26 : vector<8x1xf32> to vector<8x256xf32>
    %29 = arith.addf %23, %28 : vector<8x256xf32>
    %30 = math.tanh %29 : vector<8x256xf32>
    %31 = vector.broadcast %27 : vector<8x1xf32> to vector<8x256xf32>
    %32 = arith.addf %23, %31 : vector<8x256xf32>
    %33 = math.tanh %32 : vector<8x256xf32>
    %34 = vector.broadcast %26 : vector<8x1xf32> to vector<8x256xf32>
    %35 = arith.addf %25, %34 : vector<8x256xf32>
    %36 = math.tanh %35 : vector<8x256xf32>
    %37 = vector.broadcast %2 : f32 to vector<8x256xf32>
    %38 = arith.mulf %37, %30 : vector<8x256xf32>
    %39 = vector.broadcast %3 : f32 to vector<8x256xf32>
    %40 = arith.mulf %39, %33 : vector<8x256xf32>
    %41 = arith.addf %38, %40 : vector<8x256xf32>
    %42 = vector.broadcast %4 : f32 to vector<8x256xf32>
    %43 = arith.mulf %42, %36 : vector<8x256xf32>
    %44 = arith.addf %41, %43 : vector<8x256xf32>
    %c0_21 = arith.constant 0 : index
    %c0_22 = arith.constant 0 : index
    %45 = vector.load %arg9[%c0_21, %c0_22] : memref<8x256xf32, #tpu.memory_space<vmem>>, vector<8x256xf32>
    tpu.vector_store %arg9[%c0_21, %c0_22], %44 {strides = array<i32>} : memref<8x256xf32, #tpu.memory_space<vmem>>, vector<8x256xf32>,
    return
  }
}

</mosaic_0001>

<llo_original>
// kernel: _cfg_denoiser_jit.1
$region0: #{_cfg_denoiser_jit.1}
  #allocation0 [shape = 'u32[]', space=smem, size = 0x4, offset = 0x4, fixed_abs, tag = 'smem constant byte address 0x4 - core index']
  #allocation1 [shape = 'u32[144,128]{1,0:T(1,128)}', space=vmem, size = 0x12000, scoped, tag = 'internal scratch']
  %s0 = inlined_call_operand.vmem [shape: f32[2], index: 0, kind: input, shape index: {}]
  %s1 = inlined_call_operand.vmem [shape: f32[8,1], index: 1, kind: input, shape index: {}]
  %s2 = inlined_call_operand.vmem [shape: f32[8,256], index: 2, kind: input, shape index: {}]
  %s3 = inlined_call_operand.vmem [shape: f32[8,256], index: 3, kind: input, shape index: {}]
  %s4 = inlined_call_operand.vmem [shape: f32[8,256], index: 4, kind: input, shape index: {}]
  %s5 = inlined_call_operand.vmem [shape: f32[8,1], index: 5, kind: input, shape index: {}]
  %s6 = inlined_call_operand.vmem [shape: f32[8,1], index: 6, kind: input, shape index: {}]
  %s7 = inlined_call_operand.vmem [shape: f32[8,8], index: 7, kind: input, shape index: {}]
  %s8 = inlined_call_operand.vmem [shape: f32[8,8], index: 8, kind: input, shape index: {}]
  %s9 = inlined_call_operand.vmem [shape: f32[8,256], index: 9, kind: output, shape index: {}]
  %s10 = sld [smem:[#allocation0]]
  $region50: #{_cfg_denoiser_jit.1} parent=0
    _
  %s12 = ssub.s32 1, %s10
  %s13 = scalar_select 0, %s12, %s10
  $region1: #{_cfg_denoiser_jit.1} parent=0
    #allocation2 [shape = 'u8[512]{0}', space=smem, size = 0x200, scoped, tag = 'input window, operand 0, single buffered']
    #allocation3 [shape = 's32[1]{0}', space=sflag, size = 0x4, scoped, tag = 'scoped memory for _cfg_denoiser_jit.1']
    %14 = vsyncpa [#allocation3], 0
    // Predicated region
    $region2: #{_cfg_denoiser_jit.1} parent=1 // pred_check
      _
    $region3: #{_cfg_denoiser_jit.1} parent=1 // pred_check_branch
      %16 = sbr.rel (0) target = $region5
    $region4: #{_cfg_denoiser_jit.1} parent=1 // pred_region
      %s18 = ssub.s32 16, 16
      %19 = vsyncadd [#allocation3], %s18
      %s21 = sshll.u32 %s0, 4
      %s22 = int_to_ptr.vmem [resolvable:$true] %s21
      %24 = dma.vmem_to_smem %s22, 16, [#allocation2], [#allocation3]
    $region5: #{_cfg_denoiser_jit.1} parent=1 // pred_fallthru
      _
    // Predicated region
    $region6: #{_cfg_denoiser_jit.1} parent=1 // pred_check
      _
    $region7: #{_cfg_denoiser_jit.1} parent=1 // pred_check_branch
      %26 = sbr.rel (0) target = $region9
    $region8: #{_cfg_denoiser_jit.1} parent=1 // pred_region
      _
    $region9: #{_cfg_denoiser_jit.1} parent=1 // pred_fallthru
      _
    // Predicated region
    $region10: #{_cfg_denoiser_jit.1} parent=1 // pred_check
      _
    $region11: #{_cfg_denoiser_jit.1} parent=1 // pred_check_branch
      %28 = sbr.rel (0) target = $region13
    $region12: #{_cfg_denoiser_jit.1} parent=1 // pred_region
      _
    $region13: #{_cfg_denoiser_jit.1} parent=1 // pred_fallthru
      _
    // Predicated region
    $region14: #{_cfg_denoiser_jit.1} parent=1 // pred_check
      _
    $region15: #{_cfg_denoiser_jit.1} parent=1 // pred_check_branch
      %30 = sbr.rel (0) target = $region17
    $region16: #{_cfg_denoiser_jit.1} parent=1 // pred_region
      _
    $region17: #{_cfg_denoiser_jit.1} parent=1 // pred_fallthru
      _
    // Predicated region
    $region18: #{_cfg_denoiser_jit.1} parent=1 // pred_check
      _
    $region19: #{_cfg_denoiser_jit.1} parent=1 // pred_check_branch
      %32 = sbr.rel (0) target = $region21
    $region20: #{_cfg_denoiser_jit.1} parent=1 // pred_region
      _
    $region21: #{_cfg_denoiser_jit.1} parent=1 // pred_fallthru
      _
    // Predicated region
    $region22: #{_cfg_denoiser_jit.1} parent=1 // pred_check
      _
    $region23: #{_cfg_denoiser_jit.1} parent=1 // pred_check_branch
      %34 = sbr.rel (0) target = $region25
    $region24: #{_cfg_denoiser_jit.1} parent=1 // pred_region
      _
    $region25: #{_cfg_denoiser_jit.1} parent=1 // pred_fallthru
      _
    // Predicated region
    $region26: #{_cfg_denoiser_jit.1} parent=1 // pred_check
      _
    $region27: #{_cfg_denoiser_jit.1} parent=1 // pred_check_branch
      %36 = sbr.rel (0) target = $region29
    $region28: #{_cfg_denoiser_jit.1} parent=1 // pred_region
      _
    $region29: #{_cfg_denoiser_jit.1} parent=1 // pred_fallthru
      _
    // Predicated region
    $region30: #{_cfg_denoiser_jit.1} parent=1 // pred_check
      _
    $region31: #{_cfg_denoiser_jit.1} parent=1 // pred_check_branch
      %38 = sbr.rel (0) target = $region33
    $region32: #{_cfg_denoiser_jit.1} parent=1 // pred_region
      _
    $region33: #{_cfg_denoiser_jit.1} parent=1 // pred_fallthru
      _
    // Predicated region
    $region34: #{_cfg_denoiser_jit.1} parent=1 // pred_check
      _
    $region35: #{_cfg_denoiser_jit.1} parent=1 // pred_check_branch
      %40 = sbr.rel (0) target = $region37
    $region36: #{_cfg_denoiser_jit.1} parent=1 // pred_region
      _
    $region37: #{_cfg_denoiser_jit.1} parent=1 // pred_fallthru
      _
    // Predicated region
    $region38: #{_cfg_denoiser_jit.1} parent=1 // pred_check
      _
    $region39: #{_cfg_denoiser_jit.1} parent=1 // pred_check_branch
      %42 = sbr.rel (0) target = $region41
    $region40: #{_cfg_denoiser_jit.1} parent=1 // pred_region
      %43 = dma.done [#allocation3], 16
    $region41: #{_cfg_denoiser_jit.1} parent=1 // pred_fallthru
      _
    %44 = sfence
    %s45 = sld [smem:[#allocation2]]
    %s46 = sld [smem:[#allocation2 + $0x1]]
    %s47 = sadd.f32 %s45, %s46
    %s48 = ssub.f32 0.5, %s45
    %s49 = ssub.f32 0.5, %s46
    %v50 = vld [vmem:[%s1] sm:$0xff]
    %v51 = vmul.f32 %v50, %v50
    %v52 = vadd.f32 %v51, 1.0
    %v53 = vrsqrt.pop %v52
    %v54 = vld [vmem:[%s2] sm:$0xff]
    %v55 = vld [vmem:[%s2 + $0x8] sm:$0xff]
    %57 = vset.pattern.permute.xlu0 0
    %58 = vperm.xlu0 %57, %v53
    %v59 = vpop.permute.xlu0 %58
    %v61 = vmul.f32 %v54, %v59
    %v62 = vmul.f32 %v55, %v59
    %v63 = vld [vmem:[%s3] sm:$0xff]
    %v64 = vld [vmem:[%s3 + $0x8] sm:$0xff]
    %v65 = vmul.f32 %v63, %v59
    %v66 = vmul.f32 %v64, %v59
    %v67 = vld [vmem:[%s4] sm:$0xff]
    %v68 = vld [vmem:[%s4 + $0x8] sm:$0xff]
    %v69 = vmul.f32 %v67, %v59
    %v70 = vmul.f32 %v68, %v59
    %v71 = vld [vmem:[%s7] sm:$0xff]
    %v72 = vld [vmem:[%s8] sm:$0xff]
    %vm73 = vcmask 64512
    %v75 = vsel %vm73, %v71, 0
    %77 = vmatprep.subr.mxu0 0.0
    %78 = vmatpush1.msra.mxu0 0.0
    %79 = vmatprep.subr.mxu0 0.0
    %80 = vmatpush1.msra.mxu0 0.0
    %81 = vmatprep.subr.mxu0 0.0
    %82 = vmatpush1.msra.mxu0 0.0
    %83 = vmatprep.subr.mxu0 0.0
    %84 = vmatpush1.msra.mxu0 0.0
    %85 = vmatprep.subr.mxu0 0.0
    %86 = vmatpush1.msra.mxu0 0.0
    %87 = vmatprep.subr.mxu0 0.0
    %88 = vmatpush1.msra.mxu0 0.0
    %89 = vmatprep.subr.mxu0 0.0
    %90 = vmatpush1.msra.mxu0 0.0
    %91 = vmatprep.subr.mxu0 0.0
    %92 = vmatpush1.msra.mxu0 0.0
    %93 = vmatprep.subr.mxu0 0.0
    %94 = vmatpush1.msra.mxu0 0.0
    %95 = vmatprep.subr.mxu0 0.0
    %96 = vmatpush1.msra.mxu0 0.0
    %97 = vmatprep.subr.mxu0 0.0
    %98 = vmatpush1.msra.mxu0 0.0
    %99 = vmatprep.subr.mxu0 0.0
    %100 = vmatpush1.msra.mxu0 0.0
    %101 = vmatprep.subr.mxu0 0.0
    %102 = vmatpush1.msra.mxu0 0.0
    %103 = vmatprep.subr.mxu0 0.0
    %104 = vmatpush1.msra.mxu0 0.0
    %105 = vmatprep.subr.mxu0 0.0
    %106 = vmatpush1.msra.mxu0 0.0
    %107 = vmatprep.subr.mxu0 %v62
    %108 = vmatpush1.msra.mxu0 %v61
    %109 = vmatprep.subr.mxu0 0.0
    %110 = vmatpush2.msra.mxu0 0.0
    %111 = vmatprep.subr.mxu0 0.0
    %112 = vmatpush2.msra.mxu0 0.0
    %113 = vmatprep.subr.mxu0 0.0
    %114 = vmatpush2.msra.mxu0 0.0
    %115 = vmatprep.subr.mxu0 0.0
    %116 = vmatpush2.msra.mxu0 0.0
    %117 = vmatprep.subr.mxu0 0.0
    %118 = vmatpush2.msra.mxu0 0.0
    %119 = vmatprep.subr.mxu0 0.0
    %120 = vmatpush2.msra.mxu0 0.0
    %121 = vmatprep.subr.mxu0 0.0
    %122 = vmatpush2.msra.mxu0 0.0
    %123 = vmatprep.subr.mxu0 0.0
    %124 = vmatpush2.msra.mxu0 0.0
    %125 = vmatprep.subr.mxu0 0.0
    %126 = vmatpush2.msra.mxu0 0.0
    %127 = vmatprep.subr.mxu0 0.0
    %128 = vmatpush2.msra.mxu0 0.0
    %129 = vmatprep.subr.mxu0 0.0
    %130 = vmatpush2.msra.mxu0 0.0
    %131 = vmatprep.subr.mxu0 0.0
    %132 = vmatpush2.msra.mxu0 0.0
    %133 = vmatprep.subr.mxu0 0.0
    %134 = vmatpush2.msra.mxu0 0.0
    %135 = vmatprep.subr.mxu0 0.0
    %136 = vmatpush2.msra.mxu0 0.0
    %137 = vmatprep.subr.mxu0 0.0
    %138 = vmatpush2.msra.mxu0 0.0
    %139 = vmatprep.subr.mxu0 0.0
    %140 = vmatpush2.msra.mxu0 0.0
    %141 = vmatprep.mubr.f32.mxu0 0.0
    %142 = vmatmul.mubr.f32.gmra.mxu0 %v75
    %v143 = vpop.f32.mrf.mxu0
    %v144 = vadd.f32 0.0, %v143
    %v145 = vpop.f32.mrf.mxu0
    %v146 = vadd.f32 0.0, %v145
    %147 = vdwg.mxu0
    %v149 = vsel %vm73, %v72, 0
    %151 = vmatprep.subr.mxu0 0.0
    %152 = vmatpush1.msra.mxu0 0.0
    %153 = vmatprep.subr.mxu0 0.0
    %154 = vmatpush1.msra.mxu0 0.0
    %155 = vmatprep.subr.mxu0 0.0
    %156 = vmatpush1.msra.mxu0 0.0
    %157 = vmatprep.subr.mxu0 0.0
    %158 = vmatpush1.msra.mxu0 0.0
    %159 = vmatprep.subr.mxu0 0.0
    %160 = vmatpush1.msra.mxu0 0.0
    %161 = vmatprep.subr.mxu0 0.0
    %162 = vmatpush1.msra.mxu0 0.0
    %163 = vmatprep.subr.mxu0 0.0
    %164 = vmatpush1.msra.mxu0 0.0
    %165 = vmatprep.subr.mxu0 0.0
    %166 = vmatpush1.msra.mxu0 0.0
    %167 = vmatprep.subr.mxu0 0.0
    %168 = vmatpush1.msra.mxu0 0.0
    %169 = vmatprep.subr.mxu0 0.0
    %170 = vmatpush1.msra.mxu0 0.0
    %171 = vmatprep.subr.mxu0 0.0
    %172 = vmatpush1.msra.mxu0 0.0
    %173 = vmatprep.subr.mxu0 0.0
    %174 = vmatpush1.msra.mxu0 0.0
    %175 = vmatprep.subr.mxu0 0.0
    %176 = vmatpush1.msra.mxu0 0.0
    %177 = vmatprep.subr.mxu0 0.0
    %178 = vmatpush1.msra.mxu0 0.0
    %179 = vmatprep.subr.mxu0 0.0
    %180 = vmatpush1.msra.mxu0 0.0
    %181 = vmatprep.subr.mxu0 %v66
    %182 = vmatpush1.msra.mxu0 %v65
    %183 = vmatprep.subr.mxu0 0.0
    %184 = vmatpush2.msra.mxu0 0.0
    %185 = vmatprep.subr.mxu0 0.0
    %186 = vmatpush2.msra.mxu0 0.0
    %187 = vmatprep.subr.mxu0 0.0
    %188 = vmatpush2.msra.mxu0 0.0
    %189 = vmatprep.subr.mxu0 0.0
    %190 = vmatpush2.msra.mxu0 0.0
    %191 = vmatprep.subr.mxu0 0.0
    %192 = vmatpush2.msra.mxu0 0.0
    %193 = vmatprep.subr.mxu0 0.0
    %194 = vmatpush2.msra.mxu0 0.0
    %195 = vmatprep.subr.mxu0 0.0
    %196 = vmatpush2.msra.mxu0 0.0
    %197 = vmatprep.subr.mxu0 0.0
    %198 = vmatpush2.msra.mxu0 0.0
    %199 = vmatprep.subr.mxu0 0.0
    %200 = vmatpush2.msra.mxu0 0.0
    %201 = vmatprep.subr.mxu0 0.0
    %202 = vmatpush2.msra.mxu0 0.0
    %203 = vmatprep.subr.mxu0 0.0
    %204 = vmatpush2.msra.mxu0 0.0
    %205 = vmatprep.subr.mxu0 0.0
    %206 = vmatpush2.msra.mxu0 0.0
    %207 = vmatprep.subr.mxu0 0.0
    %208 = vmatpush2.msra.mxu0 0.0
    %209 = vmatprep.subr.mxu0 0.0
    %210 = vmatpush2.msra.mxu0 0.0
    %211 = vmatprep.subr.mxu0 0.0
    %212 = vmatpush2.msra.mxu0 0.0
    %213 = vmatprep.subr.mxu0 0.0
    %214 = vmatpush2.msra.mxu0 0.0
    %215 = vmatprep.mubr.f32.mxu0 0.0
    %216 = vmatmul.mubr.f32.gmra.mxu0 %v149
    %v217 = vpop.f32.mrf.mxu0
    %v218 = vadd.f32 0.0, %v217
    %v219 = vpop.f32.mrf.mxu0
    %v220 = vadd.f32 0.0, %v219
    %221 = vdwg.mxu0
    %v222 = vadd.f32 %v144, %v218
    %v223 = vadd.f32 %v146, %v220
    %224 = vmatprep.subr.mxu0 0.0
    %225 = vmatpush1.msra.mxu0 0.0
    %226 = vmatprep.subr.mxu0 0.0
    %227 = vmatpush1.msra.mxu0 0.0
    %228 = vmatprep.subr.mxu0 0.0
    %229 = vmatpush1.msra.mxu0 0.0
    %230 = vmatprep.subr.mxu0 0.0
    %231 = vmatpush1.msra.mxu0 0.0
    %232 = vmatprep.subr.mxu0 0.0
    %233 = vmatpush1.msra.mxu0 0.0
    %234 = vmatprep.subr.mxu0 0.0
    %235 = vmatpush1.msra.mxu0 0.0
    %236 = vmatprep.subr.mxu0 0.0
    %237 = vmatpush1.msra.mxu0 0.0
    %238 = vmatprep.subr.mxu0 0.0
    %239 = vmatpush1.msra.mxu0 0.0
    %240 = vmatprep.subr.mxu0 0.0
    %241 = vmatpush1.msra.mxu0 0.0
    %242 = vmatprep.subr.mxu0 0.0
    %243 = vmatpush1.msra.mxu0 0.0
    %244 = vmatprep.subr.mxu0 0.0
    %245 = vmatpush1.msra.mxu0 0.0
    %246 = vmatprep.subr.mxu0 0.0
    %247 = vmatpush1.msra.mxu0 0.0
    %248 = vmatprep.subr.mxu0 0.0
    %249 = vmatpush1.msra.mxu0 0.0
    %250 = vmatprep.subr.mxu0 0.0
    %251 = vmatpush1.msra.mxu0 0.0
    %252 = vmatprep.subr.mxu0 0.0
    %253 = vmatpush1.msra.mxu0 0.0
    %254 = vmatprep.subr.mxu0 %v70
    %255 = vmatpush1.msra.mxu0 %v69
    %256 = vmatprep.subr.mxu0 0.0
    %257 = vmatpush2.msra.mxu0 0.0
    %258 = vmatprep.subr.mxu0 0.0
    %259 = vmatpush2.msra.mxu0 0.0
    %260 = vmatprep.subr.mxu0 0.0
    %261 = vmatpush2.msra.mxu0 0.0
    %262 = vmatprep.subr.mxu0 0.0
    %263 = vmatpush2.msra.mxu0 0.0
    %264 = vmatprep.subr.mxu0 0.0
    %265 = vmatpush2.msra.mxu0 0.0
    %266 = vmatprep.subr.mxu0 0.0
    %267 = vmatpush2.msra.mxu0 0.0
    %268 = vmatprep.subr.mxu0 0.0
    %269 = vmatpush2.msra.mxu0 0.0
    %270 = vmatprep.subr.mxu0 0.0
    %271 = vmatpush2.msra.mxu0 0.0
    %272 = vmatprep.subr.mxu0 0.0
    %273 = vmatpush2.msra.mxu0 0.0
    %274 = vmatprep.subr.mxu0 0.0
    %275 = vmatpush2.msra.mxu0 0.0
    %276 = vmatprep.subr.mxu0 0.0
    %277 = vmatpush2.msra.mxu0 0.0
    %278 = vmatprep.subr.mxu0 0.0
    %279 = vmatpush2.msra.mxu0 0.0
    %280 = vmatprep.subr.mxu0 0.0
    %281 = vmatpush2.msra.mxu0 0.0
    %282 = vmatprep.subr.mxu0 0.0
    %283 = vmatpush2.msra.mxu0 0.0
    %284 = vmatprep.subr.mxu0 0.0
    %285 = vmatpush2.msra.mxu0 0.0
    %286 = vmatprep.subr.mxu0 0.0
    %287 = vmatpush2.msra.mxu0 0.0
    %288 = vmatprep.mubr.f32.mxu0 0.0
    %289 = vmatmul.mubr.f32.gmra.mxu0 %v149
    %v290 = vpop.f32.mrf.mxu0
    %v291 = vadd.f32 0.0, %v290
    %v292 = vpop.f32.mrf.mxu0
    %v293 = vadd.f32 0.0, %v292
    %294 = vdwg.mxu0
    %v295 = vadd.f32 %v144, %v291
    %v296 = vadd.f32 %v146, %v293
    %v297 = vld [vmem:[%s5] sm:$0xff]
    %v298 = vld [vmem:[%s6] sm:$0xff]
    %300 = vset.pattern.permute.xlu0 0
    %301 = vperm.xlu0 %300, %v297
    %v302 = vpop.permute.xlu0 %301
    %v304 = vadd.f32 %v222, %v302
    %v305 = vadd.f32 %v223, %v302
    %v306 = vtanh.pop %v304
    %v307 = vtanh.pop %v305
    %309 = vset.pattern.permute.xlu0 0
    %310 = vperm.xlu0 %309, %v298
    %v311 = vpop.permute.xlu0 %310
    %v313 = vadd.f32 %v222, %v311
    %v314 = vadd.f32 %v223, %v311
    %v315 = vtanh.pop %v313
    %v316 = vtanh.pop %v314
    %v317 = vadd.f32 %v295, %v302
    %v318 = vadd.f32 %v296, %v302
    %v319 = vtanh.pop %v317
    %v320 = vtanh.pop %v318
    %v321 = vstv %s47
    %v322 = vmul.f32 %v321, %v306
    %v323 = vmul.f32 %v321, %v307
    %v324 = vstv %s48
    %v325 = vmul.f32 %v324, %v315
    %v326 = vmul.f32 %v324, %v316
    %v327 = vadd.f32 %v322, %v325
    %v328 = vadd.f32 %v323, %v326
    %v329 = vstv %s49
    %v330 = vmul.f32 %v329, %v319
    %v331 = vmul.f32 %v329, %v320
    %v332 = vadd.f32 %v327, %v330
    %v333 = vadd.f32 %v328, %v331
    %334 = vst [vmem:[%s9] sm:$0xff] %v332
    %335 = vst [vmem:[%s9 + $0x8] sm:$0xff] %v333
    // Predicated region
    $region42: #{_cfg_denoiser_jit.1} parent=1 // pred_check
      _
    $region43: #{_cfg_denoiser_jit.1} parent=1 // pred_check_branch
      %337 = sbr.rel (0) target = $region45
    $region44: #{_cfg_denoiser_jit.1} parent=1 // pred_region
      _
    $region45: #{_cfg_denoiser_jit.1} parent=1 // pred_fallthru
      _
    // Predicated region
    $region46: #{_cfg_denoiser_jit.1} parent=1 // pred_check
      _
    $region47: #{_cfg_denoiser_jit.1} parent=1 // pred_check_branch
      %339 = sbr.rel (0) target = $region49
    $region48: #{_cfg_denoiser_jit.1} parent=1 // pred_region
      _
    $region49: #{_cfg_denoiser_jit.1} parent=1 // pred_fallthru
      _
    %340 = vsyncpa [#allocation3], 1

</llo_original>
